<compile_context>
chip_gen: v7x
topology: tpu7x:2x2x1
jax: 0.10.0
libtpu: 0.0.40
codegen_flags: <defaults>
</compile_context>

<pallas_src>
import math

import jax
import jax.numpy as jnp
from jax.experimental import pallas as pl
from jax.experimental.pallas import tpu as pltpu

_LANE = 128            # lane width: minor-dim padding granularity
_SUB = 16              # sublane multiple safe for both f32 and bf16 row tiles
_MIB = 1024 * 1024


def _round_up(x, m):
    return (x + m - 1) // m * m


def _pad2(a, rows, cols):
    r, c = a.shape
    if r == rows and c == cols:
        return a
    return jnp.pad(a, ((0, rows - r), (0, cols - c)))


def _tpu_generation():
    try:
        kind = jax.devices()[0].device_kind.lower()
    except Exception:
        return None
    if "v5 lite" in kind or "v5e" in kind or "v5litepod" in kind:
        return "v5e"
    if "v6" in kind:
        return "v6e"
    if "v7" in kind:
        return "v7x"
    return None


def _vmem_capacity_bytes(gen):
    cap = 0
    try:
        cap = int(pltpu.get_tpu_info().vmem_capacity_bytes)
    except Exception:
        cap = 0
    if cap < 16 * _MIB:  # query unavailable / implausible -> per-gen fallback
        cap = {"v5e": 128, "v6e": 128, "v7x": 64}.get(gen, 64) * _MIB
    return cap


def _vmem_budget(tile_n, tile_h, d_in_pad, d_out_pad, op_bytes, out_bytes):
    """Honest per-step VMEM footprint (double-buffered blocks + scratch + h)."""
    b = 0
    b += 2 * tile_n * d_in_pad * op_bytes        # x blocks
    b += 2 * d_in_pad * tile_h * op_bytes        # W1 blocks
    b += 2 * tile_h * d_out_pad * op_bytes       # W2 blocks
    b += 2 * 8 * d_out_pad * 4                   # b2 block (sublane-padded, f32)
    b += 2 * tile_n * d_out_pad * out_bytes      # out blocks
    b += tile_n * d_out_pad * 4                  # f32 accumulator scratch
    b += tile_n * tile_h * (4 + op_bytes)        # h intermediate (f32) + operand cast
    b += 2 * _MIB                                # compiler internal scratch / headroom
    return b


# ----------------------------------------------------------------------------- kernels
def _ffn_kernel_resident(x_ref, w1_ref, w2_ref, b2_ref, o_ref):
    # Weights fully resident in VMEM (grid-constant blocks, single K step):
    # no accumulator round-trip, output written directly.
    h = jnp.dot(x_ref[...], w1_ref[...], preferred_element_type=jnp.float32)
    y = jnp.dot(h.astype(w2_ref.dtype), w2_ref[...],
                preferred_element_type=jnp.float32)
    o_ref[...] = (y + b2_ref[...]).astype(o_ref.dtype)


def _ffn_kernel_chunked(x_ref, w1_ref, w2_ref, b2_ref, o_ref, acc_ref):
    # grid = (row tiles [parallel], hidden-dim chunks [arbitrary / reduction])
    k = pl.program_id(1)

    @pl.when(k == 0)
    def _():
        acc_ref[...] = jnp.zeros_like(acc_ref)

    h = jnp.dot(x_ref[...], w1_ref[...], preferred_element_type=jnp.float32)
    acc_ref[...] += jnp.dot(h.astype(w2_ref.dtype), w2_ref[...],
                            preferred_element_type=jnp.float32)

    @pl.when(k == pl.num_programs(1) - 1)
    def _():
        o_ref[...] = (acc_ref[...] + b2_ref[...]).astype(o_ref.dtype)


# ----------------------------------------------------------------------------- wrapper
def feedforward(x, w1, b1, w2, b2, *, tile_n=None, tile_h=None,
                compute_dtype=jnp.bfloat16):
    """FeedForward forward pass:  y = (x @ W1 + b1) @ W2 + b2.

    x : (N, D_in)
    w1: (D_in, D_hid)   (== torch linear1.weight.T);  b1: (D_hid,) or (1, D_hid)
    w2: (D_hid, D_out)  (== torch linear2.weight.T);  b2: (D_out,) or (1, D_out)

    compute_dtype: MXU operand dtype (default bf16; accumulation is always f32;
        the h intermediate is cast to this dtype before the second matmul).
        Pass jnp.float32 for full-precision operands, or None to keep input dtypes.
    """
    out_dtype = x.dtype
    N, D_in = x.shape
    D_in_w, D_hid = w1.shape
    D_hid_w, D_out = w2.shape
    assert D_in == D_in_w and D_hid == D_hid_w

    b1 = jnp.asarray(b1).reshape(1, D_hid).astype(jnp.float32)
    b2 = jnp.asarray(b2).reshape(1, D_out).astype(jnp.float32)
    # Fold b1 into the output bias (exact f32 math on the wrapper side).
    b2_eff = b2 + jnp.dot(b1, w2.astype(jnp.float32),
                          precision=jax.lax.Precision.HIGHEST)

    if compute_dtype is not None:
        x = x.astype(compute_dtype)
        w1 = w1.astype(compute_dtype)
        w2 = w2.astype(compute_dtype)
    op_bytes = jnp.dtype(x.dtype).itemsize
    out_bytes = jnp.dtype(out_dtype).itemsize

    gen = _tpu_generation()
    phys_vmem = _vmem_capacity_bytes(gen)
    gran = 256 if gen in ("v6e", "v7x") else 128          # MXU granularity (hidden chunk)
    if gen in ("v5e", "v6e"):                              # 128-MiB VMEM chips
        vmem_cap = min(int(0.85 * phys_vmem), 108 * _MIB)
    else:                                                  # v7x (64 MiB/TC) / unknown
        vmem_cap = min(int(0.85 * phys_vmem), 52 * _MIB)

    d_in_pad = _round_up(D_in, _LANE)
    d_out_pad = _round_up(D_out, _LANE)
    d_hid_full = _round_up(D_hid, gran)
    n_ceil = _round_up(N, _SUB)

    # ---- Row tile: large enough to be MXU-bound; >= 2 tiles on v7x (megacore). --
    if tile_n is None:
        tile_n = {"v5e": 384, "v6e": 512, "v7x": 512}.get(gen, 512)
        tile_n = min(tile_n, n_ceil)
        if gen == "v7x" and n_ceil >= 2 * _SUB:
            tile_n = min(tile_n, _round_up((n_ceil + 1) // 2, _SUB))
    else:
        tile_n = min(tile_n, n_ceil)
    tile_n = max(_SUB, _round_up(tile_n, _SUB))

    # ---- Hidden chunk: prefer full weight residency, else largest chunk that fits.
    if tile_h is not None:
        tile_h = max(_LANE, _round_up(min(tile_h, d_hid_full), _LANE))
    else:
        cands = [d_hid_full] + [h for h in (4096, 2048, 1024, 512, 256, 128)
                                if gran <= h < d_hid_full and h % gran == 0]
        while True:
            tile_h = None
            for h in cands:
                if _vmem_budget(tile_n, h, d_in_pad, d_out_pad,
                                op_bytes, out_bytes) <= vmem_cap:
                    tile_h = h
                    break
            if tile_h is not None:
                break
            if tile_n > _SUB:
                tile_n = max(_SUB, _round_up(tile_n // 2, _SUB))
            else:
                tile_h = cands[-1]
                break

    d_hid_pad = _round_up(D_hid, tile_h)
    n_pad = _round_up(N, tile_n)
    n_row_tiles = n_pad // tile_n
    k_steps = d_hid_pad // tile_h

    x_p = _pad2(x, n_pad, d_in_pad)
    w1_p = _pad2(w1, d_in_pad, d_hid_pad)
    w2_p = _pad2(w2, d_hid_pad, d_out_pad)
    b2_p = _pad2(b2_eff, 1, d_out_pad)

    budget = _vmem_budget(tile_n, tile_h, d_in_pad, d_out_pad, op_bytes, out_bytes)
    vmem_limit = int(min(int(0.92 * phys_vmem), max(vmem_cap, budget)))

    # Honest HBM traffic: weights DMA'd once when resident (grid-constant block),
    # once per row tile when chunked along the hidden dim.
    weight_passes = 1 if k_steps == 1 else n_row_tiles
    bytes_accessed = int(
        x_p.size * op_bytes
        + (w1_p.size + w2_p.size) * op_bytes * weight_passes
        + b2_p.size * 4
        + n_pad * d_out_pad * out_bytes)
    cost = pl.CostEstimate(
        flops=int(2 * n_pad * (d_in_pad * d_hid_pad + d_hid_pad * d_out_pad)),
        transcendentals=0,
        bytes_accessed=bytes_accessed)

    if k_steps == 1:
        # Weight-resident path: 1-D row grid, weights loaded once, no accumulator.
        out_p = pl.pallas_call(
            _ffn_kernel_resident,
            out_shape=jax.ShapeDtypeStruct((n_pad, d_out_pad), out_dtype),
            grid_spec=pltpu.PrefetchScalarGridSpec(
                num_scalar_prefetch=0,
                grid=(n_row_tiles,),
                in_specs=[
                    pl.BlockSpec((tile_n, d_in_pad), lambda i: (i, 0)),       # x row tile
                    pl.BlockSpec((d_in_pad, d_hid_pad), lambda i: (0, 0)),    # W1 (resident)
                    pl.BlockSpec((d_hid_pad, d_out_pad), lambda i: (0, 0)),   # W2 (resident)
                    pl.BlockSpec((1, d_out_pad), lambda i: (0, 0)),           # folded bias
                ],
                out_specs=pl.BlockSpec((tile_n, d_out_pad), lambda i: (i, 0)),
            ),
            compiler_params=pltpu.CompilerParams(
                dimension_semantics=("parallel",),
                vmem_limit_bytes=vmem_limit),
            cost_estimate=cost,
        )(x_p, w1_p, w2_p, b2_p)
    else:
        # Hidden-dim chunked path: f32 accumulator + pl.when init/finalize.
        out_p = pl.pallas_call(
            _ffn_kernel_chunked,
            out_shape=jax.ShapeDtypeStruct((n_pad, d_out_pad), out_dtype),
            grid_spec=pltpu.PrefetchScalarGridSpec(
                num_scalar_prefetch=0,
                grid=(n_row_tiles, k_steps),
                in_specs=[
                    pl.BlockSpec((tile_n, d_in_pad), lambda i, k: (i, 0)),    # x row tile
                    pl.BlockSpec((d_in_pad, tile_h), lambda i, k: (0, k)),    # W1 hidden chunk
                    pl.BlockSpec((tile_h, d_out_pad), lambda i, k: (k, 0)),   # W2 hidden chunk
                    pl.BlockSpec((1, d_out_pad), lambda i, k: (0, 0)),        # folded bias
                ],
                out_specs=pl.BlockSpec((tile_n, d_out_pad), lambda i, k: (i, 0)),
                scratch_shapes=[pltpu.VMEM((tile_n, d_out_pad), jnp.float32)],
            ),
            compiler_params=pltpu.CompilerParams(
                dimension_semantics=("parallel", "arbitrary"),
                vmem_limit_bytes=vmem_limit),
            cost_estimate=cost,
        )(x_p, w1_p, w2_p, b2_p)

    return out_p[:N, :D_out]


if __name__ == "__main__":
    # Shapes implied by the module: input_dim=32, hidden_dim=64, output_dim=16, N=8.
    N, D_in, D_hid, D_out = 8, 32, 64, 16

    key = jax.random.PRNGKey(0)
    kx, kw1, kb1, kw2, kb2 = jax.random.split(key, 5)

    x = jax.random.normal(kx, (N, D_in), dtype=jnp.float32)
    lim1 = 1.0 / (D_in ** 0.5)
    lim2 = 1.0 / (D_hid ** 0.5)
    w1 = jax.random.uniform(kw1, (D_in, D_hid), minval=-lim1, maxval=lim1, dtype=jnp.float32)
    b1 = jax.random.uniform(kb1, (1, D_hid), minval=-lim1, maxval=lim1, dtype=jnp.float32)
    w2 = jax.random.uniform(kw2, (D_hid, D_out), minval=-lim2, maxval=lim2, dtype=jnp.float32)
    b2 = jax.random.uniform(kb2, (1, D_out), minval=-lim2, maxval=lim2, dtype=jnp.float32)

    y_ref = (x @ w1 + b1) @ w2 + b2

    # Default (bf16 operand) path.
    y = jax.block_until_ready(feedforward(x, w1, b1, w2, b2))
    assert y.shape == (N, D_out)
    assert jnp.allclose(y, y_ref, atol=3e-2, rtol=3e-2)

    # Full-precision operand path (tight tolerance).
    y32 = jax.block_until_ready(feedforward(x, w1, b1, w2, b2, compute_dtype=jnp.float32))
    assert jnp.allclose(y32, y_ref, atol=1e-4, rtol=1e-4)

    # Larger check: multi row-tile + weight-resident path (auto tiling), bf16 default.
    k2 = jax.random.split(key, 6)
    N2, Di2, Dh2, Do2 = 512, 256, 1024, 384
    x2 = jax.random.normal(k2[0], (N2, Di2), dtype=jnp.float32) * 0.5
    w1b = jax.random.normal(k2[1], (Di2, Dh2), dtype=jnp.float32) / (Di2 ** 0.5)
    b1b = jax.random.normal(k2[2], (1, Dh2), dtype=jnp.float32) * 0.1
    w2b = jax.random.normal(k2[3], (Dh2, Do2), dtype=jnp.float32) / (Dh2 ** 0.5)
    b2b = jax.random.normal(k2[4], (1, Do2), dtype=jnp.float32) * 0.1
    y2_ref = (x2 @ w1b + b1b) @ w2b + b2b

    y2 = jax.block_until_ready(feedforward(x2, w1b, b1b, w2b, b2b))
    assert y2.shape == (N2, Do2)
    assert jnp.allclose(y2, y2_ref, atol=5e-2, rtol=5e-2)

    # Hidden-dim (K) chunked accumulation path, f32 operands, explicit small tiles.
    y3 = jax.block_until_ready(
        feedforward(x2, w1b, b1b, w2b, b2b, tile_n=128, tile_h=256,
                    compute_dtype=jnp.float32))
    assert jnp.allclose(y3, y2_ref, atol=2e-2, rtol=2e-2)

    print("KERNEL_OK")
</pallas_src>

<mosaic_0001>
module attributes {stable_mosaic.version = 11 : i64} {
  func.func @_ffn_kernel_resident(%arg0: i32, %arg1: memref<16x128xbf16, #tpu.memory_space<vmem>>, %arg2: memref<128x128xbf16, #tpu.memory_space<vmem>>, %arg3: memref<128x128xbf16, #tpu.memory_space<vmem>>, %arg4: memref<1x128xf32, #tpu.memory_space<vmem>>, %arg5: memref<16x128xf32, #tpu.memory_space<vmem>>) attributes {dimension_semantics = [#tpu.dimension_semantics<parallel>], iteration_bounds = array<i64: 1>, scalar_prefetch = 0 : i64, scratch_operands = 0 : i64, tpu.core_type = #tpu.core_type<tc>, window_params = [{transform_indices = @transform_0, window_bounds = array<i64: 16, 128>}, {pipeline_mode = #tpu.pipeline_mode<synchronous>, transform_indices = @transform_1, window_bounds = array<i64: 128, 128>}, {pipeline_mode = #tpu.pipeline_mode<synchronous>, transform_indices = @transform_2, window_bounds = array<i64: 128, 128>}, {pipeline_mode = #tpu.pipeline_mode<synchronous>, transform_indices = @transform_3, window_bounds = array<i64: 1, 128>}, {transform_indices = @transform_4, window_bounds = array<i64: 16, 128>}]} {
    %c0 = arith.constant 0 : index
    %c0_0 = arith.constant 0 : index
    %0 = vector.load %arg1[%c0, %c0_0] : memref<16x128xbf16, #tpu.memory_space<vmem>>, vector<16x128xbf16>
    %c0_1 = arith.constant 0 : index
    %c0_2 = arith.constant 0 : index
    %1 = vector.load %arg2[%c0_1, %c0_2] : memref<128x128xbf16, #tpu.memory_space<vmem>>, vector<128x128xbf16>
    %cst = arith.constant dense<0.000000e+00> : vector<16x128xf32>
    %2 = tpu.matmul %0, %1, %cst {dimension_numbers = #tpu.dot_dimension_numbers<[1], [0], [0], [1], [0, 0, 1, 1], [], []>} : vector<16x128xbf16>, vector<128x128xbf16>, vector<16x128xf32> -> vector<16x128xf32>
    %3 = arith.truncf %2 : vector<16x128xf32> to vector<16x128xbf16>
    %c0_3 = arith.constant 0 : index
    %c0_4 = arith.constant 0 : index
    %4 = vector.load %arg3[%c0_3, %c0_4] : memref<128x128xbf16, #tpu.memory_space<vmem>>, vector<128x128xbf16>
    %cst_5 = arith.constant dense<0.000000e+00> : vector<16x128xf32>
    %5 = tpu.matmul %3, %4, %cst_5 {dimension_numbers = #tpu.dot_dimension_numbers<[1], [0], [0], [1], [0, 0, 1, 1], [], []>} : vector<16x128xbf16>, vector<128x128xbf16>, vector<16x128xf32> -> vector<16x128xf32>
    %c0_6 = arith.constant 0 : index
    %c0_7 = arith.constant 0 : index
    %6 = vector.load %arg4[%c0_6, %c0_7] : memref<1x128xf32, #tpu.memory_space<vmem>>, vector<1x128xf32>
    %7 = vector.broadcast %6 : vector<1x128xf32> to vector<16x128xf32>
    %8 = arith.addf %5, %7 : vector<16x128xf32>
    %c0_8 = arith.constant 0 : index
    %c0_9 = arith.constant 0 : index
    %9 = vector.load %arg5[%c0_8, %c0_9] : memref<16x128xf32, #tpu.memory_space<vmem>>, vector<16x128xf32>
    tpu.vector_store %arg5[%c0_8, %c0_9], %8 {strides = array<i32>} : memref<16x128xf32, #tpu.memory_space<vmem>>, vector<16x128xf32>,
    return
  }
  func.func @transform_0(%arg0: i32) -> (i32, i32) {
    %c0_i32 = arith.constant 0 : i32
    %c0_i32_0 = arith.constant 0 : i32
    return %arg0, %c0_i32 : i32, i32
  }
  func.func @transform_1(%arg0: i32) -> (i32, i32) {
    %c0_i32 = arith.constant 0 : i32
    %c0_i32_0 = arith.constant 0 : i32
    %c0_i32_1 = arith.constant 0 : i32
    return %c0_i32, %c0_i32_0 : i32, i32
  }
  func.func @transform_2(%arg0: i32) -> (i32, i32) {
    %c0_i32 = arith.constant 0 : i32
    %c0_i32_0 = arith.constant 0 : i32
    %c0_i32_1 = arith.constant 0 : i32
    return %c0_i32, %c0_i32_0 : i32, i32
  }
  func.func @transform_3(%arg0: i32) -> (i32, i32) {
    %c0_i32 = arith.constant 0 : i32
    %c0_i32_0 = arith.constant 0 : i32
    %c0_i32_1 = arith.constant 0 : i32
    return %c0_i32, %c0_i32_0 : i32, i32
  }
  func.func @transform_4(%arg0: i32) -> (i32, i32) {
    %c0_i32 = arith.constant 0 : i32
    %c0_i32_0 = arith.constant 0 : i32
    return %arg0, %c0_i32 : i32, i32
  }
}

</mosaic_0001>

<llo_original>
// kernel: tpu_custom_call.1
$region0: #{tpu_custom_call.1}
  #allocation0 [shape = 'u32[]', space=smem, size = 0x4, offset = 0x4, fixed_abs, tag = 'smem constant byte address 0x4 - core index']
  #allocation1 [shape = 'u32[144,128]{1,0:T(1,128)}', space=vmem, size = 0x12000, scoped, tag = 'internal scratch']
  %s0 = inlined_call_operand.hbm [shape: bf16[16,128], index: 0, kind: input, shape index: {}]
  %s1 = inlined_call_operand.hbm [shape: bf16[128,128], index: 1, kind: input, shape index: {}]
  %s2 = inlined_call_operand.hbm [shape: bf16[128,128], index: 2, kind: input, shape index: {}]
  %s3 = inlined_call_operand.vmem [shape: f32[1,128], index: 3, kind: input, shape index: {}]
  %s4 = inlined_call_operand.hbm [shape: f32[16,128], index: 4, kind: output, shape index: {}]
  %s5 = sld [smem:[#allocation0]]
  $region38: #{tpu_custom_call.1} parent=0
    _
  %s7 = ssub.s32 1, %s5
  %s8 = scalar_select 0, %s7, %s5
  $region1: #{tpu_custom_call.1} parent=0
    #allocation2 [shape = 'u8[4096]{0}', space=vmem, size = 0x1000, scoped, tag = 'input window, operand 0, single buffered']
    #allocation3 [shape = 's32[1]{0}', space=sflag, size = 0x4, scoped, tag = 'scoped memory for tpu_custom_call.1']
    #allocation4 [shape = 's32[1]{0}', space=sflag, size = 0x4, scoped, tag = 'scoped memory for tpu_custom_call.1']
    #allocation5 [shape = 'u8[32768]{0}', space=vmem, size = 0x8000, scoped, tag = 'input window, operand 1, single buffered']
    #allocation6 [shape = 's32[1]{0}', space=sflag, size = 0x4, scoped, tag = 'scoped memory for tpu_custom_call.1']
    #allocation7 [shape = 'u8[32768]{0}', space=vmem, size = 0x8000, scoped, tag = 'input window, operand 2, single buffered']
    #allocation8 [shape = 'u8[8192]{0}', space=vmem, size = 0x2000, scoped, tag = 'output window, operand 0, single buffered']
    %9 = vsyncpa [#allocation3], 0
    %10 = vsyncpa [#allocation6], 0
    %11 = vsyncpa [#allocation4], 0
    // Predicated region
    $region2: #{tpu_custom_call.1} parent=1 // pred_check
      _
    $region3: #{tpu_custom_call.1} parent=1 // pred_check_branch
      %13 = sbr.rel (0) target = $region5
    $region4: #{tpu_custom_call.1} parent=1 // pred_region
      %s15 = ssub.s32 128, 128
      %16 = vsyncadd [#allocation3], %s15
      %s17 = sshll.u32 [#allocation2], 4
      %s18 = int_to_ptr.vmem [resolvable:$true] %s17
      %23 = dma.hbm_to_vmem [thread:$0]  %s0, 128, %s18, [#allocation3], 64, 64, 4
    $region5: #{tpu_custom_call.1} parent=1 // pred_fallthru
      _
    // Predicated region
    $region6: #{tpu_custom_call.1} parent=1 // pred_check
      _
    $region7: #{tpu_custom_call.1} parent=1 // pred_check_branch
      %25 = sbr.rel (0) target = $region9
    $region8: #{tpu_custom_call.1} parent=1 // pred_region
      %s27 = ssub.s32 1024, 1024
      %28 = vsyncadd [#allocation6], %s27
      %s29 = sshll.u32 [#allocation5], 4
      %s30 = int_to_ptr.vmem [resolvable:$true] %s29
      %35 = dma.hbm_to_vmem [thread:$0]  %s1, 1024, %s30, [#allocation6], 64, 64, 4
    $region9: #{tpu_custom_call.1} parent=1 // pred_fallthru
      _
    // Predicated region
    $region10: #{tpu_custom_call.1} parent=1 // pred_check
      _
    $region11: #{tpu_custom_call.1} parent=1 // pred_check_branch
      %37 = sbr.rel (0) target = $region13
    $region12: #{tpu_custom_call.1} parent=1 // pred_region
      %s39 = ssub.s32 1024, 1024
      %40 = vsyncadd [#allocation6], %s39
      %s41 = sshll.u32 [#allocation7], 4
      %s42 = int_to_ptr.vmem [resolvable:$true] %s41
      %47 = dma.hbm_to_vmem [thread:$0]  %s2, 1024, %s42, [#allocation6], 64, 64, 4
    $region13: #{tpu_custom_call.1} parent=1 // pred_fallthru
      _
    // Predicated region
    $region14: #{tpu_custom_call.1} parent=1 // pred_check
      _
    $region15: #{tpu_custom_call.1} parent=1 // pred_check_branch
      %49 = sbr.rel (0) target = $region17
    $region16: #{tpu_custom_call.1} parent=1 // pred_region
      _
    $region17: #{tpu_custom_call.1} parent=1 // pred_fallthru
      _
    // Predicated region
    $region18: #{tpu_custom_call.1} parent=1 // pred_check
      _
    $region19: #{tpu_custom_call.1} parent=1 // pred_check_branch
      %51 = sbr.rel (0) target = $region21
    $region20: #{tpu_custom_call.1} parent=1 // pred_region
      %52 = dma.done [#allocation3], 128
    $region21: #{tpu_custom_call.1} parent=1 // pred_fallthru
      _
    // Predicated region
    $region22: #{tpu_custom_call.1} parent=1 // pred_check
      _
    $region23: #{tpu_custom_call.1} parent=1 // pred_check_branch
      %54 = sbr.rel (0) target = $region25
    $region24: #{tpu_custom_call.1} parent=1 // pred_region
      %55 = dma.done [#allocation6], 1024
    $region25: #{tpu_custom_call.1} parent=1 // pred_fallthru
      _
    // Predicated region
    $region26: #{tpu_custom_call.1} parent=1 // pred_check
      _
    $region27: #{tpu_custom_call.1} parent=1 // pred_check_branch
      %57 = sbr.rel (0) target = $region29
    $region28: #{tpu_custom_call.1} parent=1 // pred_region
      %58 = dma.done [#allocation6], 1024
    $region29: #{tpu_custom_call.1} parent=1 // pred_fallthru
      _
    %v60 = vld [vmem:[#allocation2] sm:$0xf]
    %v61 = vld [vmem:[#allocation2 + $0x4] sm:$0xf]
    %v62 = vld [vmem:[#allocation5] sm:$0xf]
    %v63 = vld [vmem:[#allocation5 + $0x4] sm:$0xf]
    %v64 = vld [vmem:[#allocation5 + $0x8] sm:$0xf]
    %v65 = vld [vmem:[#allocation5 + $0xc] sm:$0xf]
    %v66 = vld [vmem:[#allocation5 + $0x10] sm:$0xf]
    %v67 = vld [vmem:[#allocation5 + $0x14] sm:$0xf]
    %v68 = vld [vmem:[#allocation5 + $0x18] sm:$0xf]
    %v69 = vld [vmem:[#allocation5 + $0x1c] sm:$0xf]
    %v70 = vld [vmem:[#allocation5 + $0x20] sm:$0xf]
    %v71 = vld [vmem:[#allocation5 + $0x24] sm:$0xf]
    %v72 = vld [vmem:[#allocation5 + $0x28] sm:$0xf]
    %v73 = vld [vmem:[#allocation5 + $0x2c] sm:$0xf]
    %v74 = vld [vmem:[#allocation5 + $0x30] sm:$0xf]
    %v75 = vld [vmem:[#allocation5 + $0x34] sm:$0xf]
    %v76 = vld [vmem:[#allocation5 + $0x38] sm:$0xf]
    %v77 = vld [vmem:[#allocation5 + $0x3c] sm:$0xf]
    %v80 = vunpack.c.l.b16 %v60
    %v81 = vunpack.c.l.b16 %v61
    %v82 = vpack.c.b16 %v81, %v80
    %v100 = vunpack.c.l.b16 %v62
    %v101 = vunpack.c.l.b16 %v63
    %v102 = vunpack.c.l.b16 %v64
    %v103 = vunpack.c.l.b16 %v65
    %v104 = vunpack.c.l.b16 %v66
    %v105 = vunpack.c.l.b16 %v67
    %v106 = vunpack.c.l.b16 %v68
    %v107 = vunpack.c.l.b16 %v69
    %v108 = vunpack.c.l.b16 %v70
    %v109 = vunpack.c.l.b16 %v71
    %v110 = vunpack.c.l.b16 %v72
    %v111 = vunpack.c.l.b16 %v73
    %v112 = vunpack.c.l.b16 %v74
    %v113 = vunpack.c.l.b16 %v75
    %v114 = vunpack.c.l.b16 %v76
    %v115 = vunpack.c.l.b16 %v77
    %v116 = vpack.c.b16 %v101, %v100
    %v117 = vpack.c.b16 %v103, %v102
    %v118 = vpack.c.b16 %v105, %v104
    %v119 = vpack.c.b16 %v107, %v106
    %v120 = vpack.c.b16 %v109, %v108
    %v121 = vpack.c.b16 %v111, %v110
    %v122 = vpack.c.b16 %v113, %v112
    %v123 = vpack.c.b16 %v115, %v114
    %132 = vmatprep.subr.bf16.mxu0 0
    %133 = vmatpush1.bf16.msra.mxu0 %v116
    %134 = vmatprep.subr.bf16.mxu0 0
    %135 = vmatpush1.bf16.msra.mxu0 %v117
    %136 = vmatprep.subr.bf16.mxu0 0
    %137 = vmatpush1.bf16.msra.mxu0 %v118
    %138 = vmatprep.subr.bf16.mxu0 0
    %139 = vmatpush1.bf16.msra.mxu0 %v119
    %140 = vmatprep.subr.bf16.mxu0 0
    %141 = vmatpush1.bf16.msra.mxu0 %v120
    %142 = vmatprep.subr.bf16.mxu0 0
    %143 = vmatpush1.bf16.msra.mxu0 %v121
    %144 = vmatprep.subr.bf16.mxu0 0
    %145 = vmatpush1.bf16.msra.mxu0 %v122
    %146 = vmatprep.subr.bf16.mxu0 0
    %147 = vmatpush1.bf16.msra.mxu0 %v123
    %148 = vmatprep.subr.bf16.mxu0 0
    %149 = vmatpush1.bf16.msra.mxu0 0
    %150 = vmatprep.subr.bf16.mxu0 0
    %151 = vmatpush1.bf16.msra.mxu0 0
    %152 = vmatprep.subr.bf16.mxu0 0
    %153 = vmatpush1.bf16.msra.mxu0 0
    %154 = vmatprep.subr.bf16.mxu0 0
    %155 = vmatpush1.bf16.msra.mxu0 0
    %156 = vmatprep.subr.bf16.mxu0 0
    %157 = vmatpush1.bf16.msra.mxu0 0
    %158 = vmatprep.subr.bf16.mxu0 0
    %159 = vmatpush1.bf16.msra.mxu0 0
    %160 = vmatprep.subr.bf16.mxu0 0
    %161 = vmatpush1.bf16.msra.mxu0 0
    %162 = vmatprep.subr.bf16.mxu0 0
    %163 = vmatpush1.bf16.msra.mxu0 0
    %164 = vmatprep.mubr.bf16.mxu0 0
    %165 = vmatmul.mubr.bf16.gmra.mrb[0].mxu0 %v82
    %v166 = vpop.f32.mrb[0].mxu0
    %v167 = vadd.f32 0.0, %v166
    %v168 = vpop.f32.mrb[0].mxu0
    %v169 = vpop.f32.mrb[0].mxu0
    %v170 = vadd.f32 0.0, %v169
    %v171 = vpop.f32.mrb[0].mxu0
    %172 = vdwg.mxu0
    %v173 = vpack.c.bf16 %v170, %v167
    %v174 = vld [vmem:[#allocation7] sm:$0xf]
    %v175 = vld [vmem:[#allocation7 + $0x4] sm:$0xf]
    %v176 = vld [vmem:[#allocation7 + $0x8] sm:$0xf]
    %v177 = vld [vmem:[#allocation7 + $0xc] sm:$0xf]
    %v178 = vld [vmem:[#allocation7 + $0x10] sm:$0xf]
    %v179 = vld [vmem:[#allocation7 + $0x14] sm:$0xf]
    %v180 = vld [vmem:[#allocation7 + $0x18] sm:$0xf]
    %v181 = vld [vmem:[#allocation7 + $0x1c] sm:$0xf]
    %v182 = vld [vmem:[#allocation7 + $0x20] sm:$0xf]
    %v183 = vld [vmem:[#allocation7 + $0x24] sm:$0xf]
    %v184 = vld [vmem:[#allocation7 + $0x28] sm:$0xf]
    %v185 = vld [vmem:[#allocation7 + $0x2c] sm:$0xf]
    %v186 = vld [vmem:[#allocation7 + $0x30] sm:$0xf]
    %v187 = vld [vmem:[#allocation7 + $0x34] sm:$0xf]
    %v188 = vld [vmem:[#allocation7 + $0x38] sm:$0xf]
    %v189 = vld [vmem:[#allocation7 + $0x3c] sm:$0xf]
    %v190 = vld [vmem:[%s3] sm:$0x1]
    %v192 = vlaneseq
    %v193 = vshrl.u32 %v192, 7
    %v194 = vsub.s32 0, %v193
    %v195 = vrot.slane %v190, %v194
    %v213 = vunpack.c.l.b16 %v174
    %v214 = vunpack.c.l.b16 %v175
    %v215 = vunpack.c.l.b16 %v176
    %v216 = vunpack.c.l.b16 %v177
    %v217 = vunpack.c.l.b16 %v178
    %v218 = vunpack.c.l.b16 %v179
    %v219 = vunpack.c.l.b16 %v180
    %v220 = vunpack.c.l.b16 %v181
    %v221 = vunpack.c.l.b16 %v182
    %v222 = vunpack.c.l.b16 %v183
    %v223 = vunpack.c.l.b16 %v184
    %v224 = vunpack.c.l.b16 %v185
    %v225 = vunpack.c.l.b16 %v186
    %v226 = vunpack.c.l.b16 %v187
    %v227 = vunpack.c.l.b16 %v188
    %v228 = vunpack.c.l.b16 %v189
    %v229 = vpack.c.b16 %v214, %v213
    %v230 = vpack.c.b16 %v216, %v215
    %v231 = vpack.c.b16 %v218, %v217
    %v232 = vpack.c.b16 %v220, %v219
    %v233 = vpack.c.b16 %v222, %v221
    %v234 = vpack.c.b16 %v224, %v223
    %v235 = vpack.c.b16 %v226, %v225
    %v236 = vpack.c.b16 %v228, %v227
    %245 = vmatprep.subr.bf16.mxu0 0
    %246 = vmatpush1.bf16.msra.mxu0 %v229
    %247 = vmatprep.subr.bf16.mxu0 0
    %248 = vmatpush1.bf16.msra.mxu0 %v230
    %249 = vmatprep.subr.bf16.mxu0 0
    %250 = vmatpush1.bf16.msra.mxu0 %v231
    %251 = vmatprep.subr.bf16.mxu0 0
    %252 = vmatpush1.bf16.msra.mxu0 %v232
    %253 = vmatprep.subr.bf16.mxu0 0
    %254 = vmatpush1.bf16.msra.mxu0 %v233
    %255 = vmatprep.subr.bf16.mxu0 0
    %256 = vmatpush1.bf16.msra.mxu0 %v234
    %257 = vmatprep.subr.bf16.mxu0 0
    %258 = vmatpush1.bf16.msra.mxu0 %v235
    %259 = vmatprep.subr.bf16.mxu0 0
    %260 = vmatpush1.bf16.msra.mxu0 %v236
    %261 = vmatprep.subr.bf16.mxu0 0
    %262 = vmatpush1.bf16.msra.mxu0 0
    %263 = vmatprep.subr.bf16.mxu0 0
    %264 = vmatpush1.bf16.msra.mxu0 0
    %265 = vmatprep.subr.bf16.mxu0 0
    %266 = vmatpush1.bf16.msra.mxu0 0
    %267 = vmatprep.subr.bf16.mxu0 0
    %268 = vmatpush1.bf16.msra.mxu0 0
    %269 = vmatprep.subr.bf16.mxu0 0
    %270 = vmatpush1.bf16.msra.mxu0 0
    %271 = vmatprep.subr.bf16.mxu0 0
    %272 = vmatpush1.bf16.msra.mxu0 0
    %273 = vmatprep.subr.bf16.mxu0 0
    %274 = vmatpush1.bf16.msra.mxu0 0
    %275 = vmatprep.subr.bf16.mxu0 0
    %276 = vmatpush1.bf16.msra.mxu0 0
    %277 = vmatprep.mubr.bf16.mxu0 0
    %278 = vmatmul.mubr.bf16.gmra.mrb[0].mxu0 %v173
    %v279 = vpop.f32.mrb[0].mxu0
    %v280 = vadd.f32 %v195, %v279
    %v281 = vpop.f32.mrb[0].mxu0
    %v282 = vpop.f32.mrb[0].mxu0
    %v283 = vadd.f32 %v195, %v282
    %v284 = vpop.f32.mrb[0].mxu0
    %285 = vdwg.mxu0
    %286 = vst [vmem:[#allocation8] sm:$0xff] %v280
    %287 = vst [vmem:[#allocation8 + $0x8] sm:$0xff] %v283
    // Predicated region
    $region30: #{tpu_custom_call.1} parent=1 // pred_check
      _
    $region31: #{tpu_custom_call.1} parent=1 // pred_check_branch
      %289 = sbr.rel (0) target = $region33
    $region32: #{tpu_custom_call.1} parent=1 // pred_region
      %s291 = ssub.s32 256, 256
      %292 = vsyncadd [#allocation4], %s291
      %s293 = sshll.u32 [#allocation8], 4
      %s294 = int_to_ptr.vmem [resolvable:$true] %s293
      %299 = dma.vmem_to_hbm [thread:$0]  %s294, 256, %s4, [#allocation4], 128, 128, 8
    $region33: #{tpu_custom_call.1} parent=1 // pred_fallthru
      _
    // Predicated region
    $region34: #{tpu_custom_call.1} parent=1 // pred_check
      _
    $region35: #{tpu_custom_call.1} parent=1 // pred_check_branch
      %301 = sbr.rel (0) target = $region37
    $region36: #{tpu_custom_call.1} parent=1 // pred_region
      %302 = dma.done [#allocation4], 256
    $region37: #{tpu_custom_call.1} parent=1 // pred_fallthru
      _
    %303 = vsyncpa [#allocation3], 1
    %304 = vsyncpa [#allocation6], 1
    %305 = vsyncpa [#allocation4], 1

</llo_original>
